<compile_context>
chip_gen: v5e
topology: v5e:2x2
jax: 0.10.0
libtpu: 0.0.40
codegen_flags: <defaults>
</compile_context>

<pallas_src>
import jax
import jax.numpy as jnp
from jax.experimental import pallas as pl
from jax.experimental.pallas import tpu as pltpu

EPS = 1e-5


def qnet_kernel(obs_ref, act_ref, w1o_ref, w1a_ref, b1_ref,
                w2_ref, b2_ref, w3_ref, b3_ref, o_ref):
    obs = obs_ref[...]   # (B, n_obs)
    act = act_ref[...]   # (B, n_act)
    B = obs.shape[0]

    def instnorm_relu(h):
        # Per-row normalization over features, biased variance, eps inside rsqrt.
        mu = jnp.mean(h, axis=-1, keepdims=True)
        d = h - mu
        var = jnp.mean(d * d, axis=-1, keepdims=True)
        return jnp.maximum(d * jax.lax.rsqrt(var + EPS), 0.0)

    def one_net(n):
        # First Linear on the *virtual* concat([obs, act]) input, expressed as
        # obs @ W1[:n_obs] + act @ W1[n_obs:] so no concat is ever materialized.
        h = (jnp.dot(obs, w1o_ref[n], preferred_element_type=jnp.float32)
             + jnp.dot(act, w1a_ref[n], preferred_element_type=jnp.float32)
             + b1_ref[n])
        h = instnorm_relu(h)
        h = jnp.dot(h, w2_ref[n], preferred_element_type=jnp.float32) + b2_ref[n]
        h = instnorm_relu(h)
        # Final Linear to a single scalar per row: VPU multiply + lane reduce
        # instead of a 1-output-lane MXU matmul.
        return jnp.sum(h * w3_ref[n], axis=-1, keepdims=True) + b3_ref[n]  # (B, 1)

    q0 = one_net(0)   # twin network 1
    q1 = one_net(1)   # twin network 2

    # Single (B, 2) store: lane 0 = q1, lane 1 = q2 (broadcast select, no concat).
    lane = jax.lax.broadcasted_iota(jnp.int32, (B, 2), 1)
    o_ref[...] = jnp.where(lane == 0, q0, q1)


def init_params(key, n_obs, n_act, hidden_dims):
    """Deterministic synthetic parameters for BOTH twin networks, stacked on axis 0.

    Returns a dict with W1 already split into its observation / action rows and
    W3 stored as a (2, 1, H2) row so the kernel can use a lane reduction.
    """
    dims = [n_obs + n_act] + list(hidden_dims) + [1]
    n_layers = len(dims) - 1
    ks = jax.random.split(key, 2 * n_layers * 2)
    ws, bs = [], []
    ki = 0
    for li in range(n_layers):
        fan_in, fan_out = dims[li], dims[li + 1]
        bound = 1.0 / float(fan_in) ** 0.5
        w_pair, b_pair = [], []
        for _net in range(2):
            w = jax.random.uniform(ks[ki], (fan_in, fan_out), jnp.float32, -bound, bound)
            b = jax.random.uniform(ks[ki + 1], (1, fan_out), jnp.float32, -bound, bound)
            ki += 2
            w_pair.append(w)
            b_pair.append(b)
        ws.append(jnp.stack(w_pair, axis=0))   # (2, fan_in, fan_out)
        bs.append(jnp.stack(b_pair, axis=0))   # (2, 1, fan_out)

    w1, w2, w3 = ws
    b1, b2, b3 = bs
    return dict(
        w1o=w1[:, :n_obs, :],                 # (2, n_obs, H1)
        w1a=w1[:, n_obs:, :],                 # (2, n_act, H1)
        b1=b1,                                # (2, 1, H1)
        w2=w2,                                # (2, H1, H2)
        b2=b2,                                # (2, 1, H2)
        w3=jnp.transpose(w3, (0, 2, 1)),      # (2, 1, H2)  row form for VPU reduce
        b3=b3,                                # (2, 1, 1)
    )


def qnetwork_forward(observations, actions, params):
    observations = observations.astype(jnp.float32)
    actions = actions.astype(jnp.float32)
    B = observations.shape[0]

    vmem = lambda: pl.BlockSpec(memory_space=pltpu.MemorySpace.VMEM)
    out = pl.pallas_call(
        qnet_kernel,
        out_shape=jax.ShapeDtypeStruct((B, 2), jnp.float32),
        in_specs=[vmem() for _ in range(9)],   # whole arrays in VMEM, no grid
        out_specs=vmem(),
    )(observations, actions,
      params["w1o"], params["w1a"], params["b1"],
      params["w2"], params["b2"],
      params["w3"], params["b3"])

    return out[:, 0:1], out[:, 1:2]   # (B, 1), (B, 1)


def _reference(observations, actions, params):
    """Pure-JAX reference mirroring the PyTorch forward."""
    def instnorm_relu(h):
        mu = jnp.mean(h, axis=-1, keepdims=True)
        var = jnp.mean((h - mu) ** 2, axis=-1, keepdims=True)
        return jnp.maximum((h - mu) / jnp.sqrt(var + EPS), 0.0)

    x = jnp.concatenate([observations, actions], axis=1).astype(jnp.float32)
    outs = []
    for n in range(2):
        w1 = jnp.concatenate([params["w1o"][n], params["w1a"][n]], axis=0)
        h = instnorm_relu(x @ w1 + params["b1"][n])
        h = instnorm_relu(h @ params["w2"][n] + params["b2"][n])
        outs.append(h @ params["w3"][n].T + params["b3"][n])
    return outs[0], outs[1]


if __name__ == "__main__":
    B = 8
    n_observations, n_actions = 12, 4
    hidden_dims = [32, 32]

    key = jax.random.PRNGKey(0)
    k_obs, k_act, k_par = jax.random.split(key, 3)
    observations = jax.random.normal(k_obs, (B, n_observations), jnp.float32)
    actions = jax.random.normal(k_act, (B, n_actions), jnp.float32)
    params = init_params(k_par, n_observations, n_actions, hidden_dims)

    q1, q2 = qnetwork_forward(observations, actions, params)
    jax.block_until_ready((q1, q2))

    r1, r2 = _reference(observations, actions, params)
    assert q1.shape == (B, 1) and q2.shape == (B, 1)
    assert jnp.allclose(q1, r1, atol=1e-4, rtol=1e-4)
    assert jnp.allclose(q2, r2, atol=1e-4, rtol=1e-4)

    print("KERNEL_OK")
</pallas_src>

<mosaic_0001>
module attributes {stable_mosaic.version = 11 : i64} {
  func.func @qnet_kernel(%arg0: memref<8x12xf32, #tpu.memory_space<vmem>>, %arg1: memref<8x4xf32, #tpu.memory_space<vmem>>, %arg2: memref<2x12x32xf32, #tpu.memory_space<vmem>>, %arg3: memref<2x4x32xf32, #tpu.memory_space<vmem>>, %arg4: memref<2x1x32xf32, #tpu.memory_space<vmem>>, %arg5: memref<2x32x32xf32, #tpu.memory_space<vmem>>, %arg6: memref<2x1x32xf32, #tpu.memory_space<vmem>>, %arg7: memref<2x1x32xf32, #tpu.memory_space<vmem>>, %arg8: memref<2x1x1xf32, #tpu.memory_space<vmem>>, %arg9: memref<8x2xf32, #tpu.memory_space<vmem>>) attributes {dimension_semantics = [], scalar_prefetch = 0 : i64, scratch_operands = 0 : i64, tpu.core_type = #tpu.core_type<tc>} {
    %c0 = arith.constant 0 : index
    %c0_0 = arith.constant 0 : index
    %0 = vector.load %arg0[%c0, %c0_0] : memref<8x12xf32, #tpu.memory_space<vmem>>, vector<8x12xf32>
    %c0_1 = arith.constant 0 : index
    %c0_2 = arith.constant 0 : index
    %1 = vector.load %arg1[%c0_1, %c0_2] : memref<8x4xf32, #tpu.memory_space<vmem>>, vector<8x4xf32>
    %c0_3 = arith.constant 0 : index
    %c0_4 = arith.constant 0 : index
    %c0_5 = arith.constant 0 : index
    %2 = vector.load %arg2[%c0_3, %c0_4, %c0_5] : memref<2x12x32xf32, #tpu.memory_space<vmem>>, vector<1x12x32xf32>
    %3 = vector.shape_cast %2 : vector<1x12x32xf32> to vector<12x32xf32>
    %cst = arith.constant dense<0.000000e+00> : vector<8x32xf32>
    %4 = tpu.matmul %0, %3, %cst {dimension_numbers = #tpu.dot_dimension_numbers<[1], [0], [0], [1], [0, 0, 1, 1], [], []>} : vector<8x12xf32>, vector<12x32xf32>, vector<8x32xf32> -> vector<8x32xf32>
    %c0_6 = arith.constant 0 : index
    %c0_7 = arith.constant 0 : index
    %c0_8 = arith.constant 0 : index
    %5 = vector.load %arg3[%c0_6, %c0_7, %c0_8] : memref<2x4x32xf32, #tpu.memory_space<vmem>>, vector<1x4x32xf32>
    %6 = vector.shape_cast %5 : vector<1x4x32xf32> to vector<4x32xf32>
    %cst_9 = arith.constant dense<0.000000e+00> : vector<8x32xf32>
    %7 = tpu.matmul %1, %6, %cst_9 {dimension_numbers = #tpu.dot_dimension_numbers<[1], [0], [0], [1], [0, 0, 1, 1], [], []>} : vector<8x4xf32>, vector<4x32xf32>, vector<8x32xf32> -> vector<8x32xf32>
    %8 = arith.addf %4, %7 : vector<8x32xf32>
    %c0_10 = arith.constant 0 : index
    %c0_11 = arith.constant 0 : index
    %c0_12 = arith.constant 0 : index
    %9 = vector.load %arg4[%c0_10, %c0_11, %c0_12] : memref<2x1x32xf32, #tpu.memory_space<vmem>>, vector<1x1x32xf32>
    %10 = vector.shape_cast %9 : vector<1x1x32xf32> to vector<1x32xf32>
    %11 = vector.broadcast %10 : vector<1x32xf32> to vector<8x32xf32>
    %12 = arith.addf %8, %11 : vector<8x32xf32>
    %cst_13 = arith.constant dense<0.000000e+00> : vector<8xf32>
    %13 = vector.multi_reduction <add>, %12, %cst_13 [1] : vector<8x32xf32> to vector<8xf32>
    %14 = vector.shape_cast %13 : vector<8xf32> to vector<8x1xf32>
    %cst_14 = arith.constant 3.200000e+01 : f32
    %15 = vector.broadcast %cst_14 : f32 to vector<8x1xf32>
    %16 = arith.divf %14, %15 : vector<8x1xf32>
    %17 = vector.broadcast %16 : vector<8x1xf32> to vector<8x32xf32>
    %18 = arith.subf %12, %17 : vector<8x32xf32>
    %19 = arith.mulf %18, %18 : vector<8x32xf32>
    %cst_15 = arith.constant dense<0.000000e+00> : vector<8xf32>
    %20 = vector.multi_reduction <add>, %19, %cst_15 [1] : vector<8x32xf32> to vector<8xf32>
    %21 = vector.shape_cast %20 : vector<8xf32> to vector<8x1xf32>
    %cst_16 = arith.constant 3.200000e+01 : f32
    %22 = vector.broadcast %cst_16 : f32 to vector<8x1xf32>
    %23 = arith.divf %21, %22 : vector<8x1xf32>
    %cst_17 = arith.constant 9.99999974E-6 : f32
    %24 = vector.broadcast %cst_17 : f32 to vector<8x1xf32>
    %25 = arith.addf %23, %24 : vector<8x1xf32>
    %26 = math.rsqrt %25 : vector<8x1xf32>
    %27 = vector.broadcast %26 : vector<8x1xf32> to vector<8x32xf32>
    %28 = arith.mulf %18, %27 : vector<8x32xf32>
    %cst_18 = arith.constant 0.000000e+00 : f32
    %29 = vector.broadcast %cst_18 : f32 to vector<8x32xf32>
    %30 = arith.maximumf %28, %29 : vector<8x32xf32>
    %c0_19 = arith.constant 0 : index
    %c0_20 = arith.constant 0 : index
    %c0_21 = arith.constant 0 : index
    %31 = vector.load %arg5[%c0_19, %c0_20, %c0_21] : memref<2x32x32xf32, #tpu.memory_space<vmem>>, vector<1x32x32xf32>
    %32 = vector.shape_cast %31 : vector<1x32x32xf32> to vector<32x32xf32>
    %cst_22 = arith.constant dense<0.000000e+00> : vector<8x32xf32>
    %33 = tpu.matmul %30, %32, %cst_22 {dimension_numbers = #tpu.dot_dimension_numbers<[1], [0], [0], [1], [0, 0, 1, 1], [], []>} : vector<8x32xf32>, vector<32x32xf32>, vector<8x32xf32> -> vector<8x32xf32>
    %c0_23 = arith.constant 0 : index
    %c0_24 = arith.constant 0 : index
    %c0_25 = arith.constant 0 : index
    %34 = vector.load %arg6[%c0_23, %c0_24, %c0_25] : memref<2x1x32xf32, #tpu.memory_space<vmem>>, vector<1x1x32xf32>
    %35 = vector.shape_cast %34 : vector<1x1x32xf32> to vector<1x32xf32>
    %36 = vector.broadcast %35 : vector<1x32xf32> to vector<8x32xf32>
    %37 = arith.addf %33, %36 : vector<8x32xf32>
    %cst_26 = arith.constant dense<0.000000e+00> : vector<8xf32>
    %38 = vector.multi_reduction <add>, %37, %cst_26 [1] : vector<8x32xf32> to vector<8xf32>
    %39 = vector.shape_cast %38 : vector<8xf32> to vector<8x1xf32>
    %cst_27 = arith.constant 3.200000e+01 : f32
    %40 = vector.broadcast %cst_27 : f32 to vector<8x1xf32>
    %41 = arith.divf %39, %40 : vector<8x1xf32>
    %42 = vector.broadcast %41 : vector<8x1xf32> to vector<8x32xf32>
    %43 = arith.subf %37, %42 : vector<8x32xf32>
    %44 = arith.mulf %43, %43 : vector<8x32xf32>
    %cst_28 = arith.constant dense<0.000000e+00> : vector<8xf32>
    %45 = vector.multi_reduction <add>, %44, %cst_28 [1] : vector<8x32xf32> to vector<8xf32>
    %46 = vector.shape_cast %45 : vector<8xf32> to vector<8x1xf32>
    %cst_29 = arith.constant 3.200000e+01 : f32
    %47 = vector.broadcast %cst_29 : f32 to vector<8x1xf32>
    %48 = arith.divf %46, %47 : vector<8x1xf32>
    %cst_30 = arith.constant 9.99999974E-6 : f32
    %49 = vector.broadcast %cst_30 : f32 to vector<8x1xf32>
    %50 = arith.addf %48, %49 : vector<8x1xf32>
    %51 = math.rsqrt %50 : vector<8x1xf32>
    %52 = vector.broadcast %51 : vector<8x1xf32> to vector<8x32xf32>
    %53 = arith.mulf %43, %52 : vector<8x32xf32>
    %cst_31 = arith.constant 0.000000e+00 : f32
    %54 = vector.broadcast %cst_31 : f32 to vector<8x32xf32>
    %55 = arith.maximumf %53, %54 : vector<8x32xf32>
    %c0_32 = arith.constant 0 : index
    %c0_33 = arith.constant 0 : index
    %c0_34 = arith.constant 0 : index
    %56 = vector.load %arg7[%c0_32, %c0_33, %c0_34] : memref<2x1x32xf32, #tpu.memory_space<vmem>>, vector<1x1x32xf32>
    %57 = vector.shape_cast %56 : vector<1x1x32xf32> to vector<1x32xf32>
    %58 = vector.broadcast %57 : vector<1x32xf32> to vector<8x32xf32>
    %59 = arith.mulf %55, %58 : vector<8x32xf32>
    %cst_35 = arith.constant dense<0.000000e+00> : vector<8xf32>
    %60 = vector.multi_reduction <add>, %59, %cst_35 [1] : vector<8x32xf32> to vector<8xf32>
    %61 = vector.shape_cast %60 : vector<8xf32> to vector<8x1xf32>
    %c0_36 = arith.constant 0 : index
    %c0_37 = arith.constant 0 : index
    %c0_38 = arith.constant 0 : index
    %62 = vector.load %arg8[%c0_36, %c0_37, %c0_38] : memref<2x1x1xf32, #tpu.memory_space<vmem>>, vector<1x1x1xf32>
    %63 = vector.shape_cast %62 : vector<1x1x1xf32> to vector<1x1xf32>
    %64 = vector.broadcast %63 : vector<1x1xf32> to vector<8x1xf32>
    %65 = arith.addf %61, %64 : vector<8x1xf32>
    %c1 = arith.constant 1 : index
    %c0_39 = arith.constant 0 : index
    %c0_40 = arith.constant 0 : index
    %66 = vector.load %arg2[%c1, %c0_39, %c0_40] : memref<2x12x32xf32, #tpu.memory_space<vmem>>, vector<1x12x32xf32>
    %67 = vector.shape_cast %66 : vector<1x12x32xf32> to vector<12x32xf32>
    %cst_41 = arith.constant dense<0.000000e+00> : vector<8x32xf32>
    %68 = tpu.matmul %0, %67, %cst_41 {dimension_numbers = #tpu.dot_dimension_numbers<[1], [0], [0], [1], [0, 0, 1, 1], [], []>} : vector<8x12xf32>, vector<12x32xf32>, vector<8x32xf32> -> vector<8x32xf32>
    %c1_42 = arith.constant 1 : index
    %c0_43 = arith.constant 0 : index
    %c0_44 = arith.constant 0 : index
    %69 = vector.load %arg3[%c1_42, %c0_43, %c0_44] : memref<2x4x32xf32, #tpu.memory_space<vmem>>, vector<1x4x32xf32>
    %70 = vector.shape_cast %69 : vector<1x4x32xf32> to vector<4x32xf32>
    %cst_45 = arith.constant dense<0.000000e+00> : vector<8x32xf32>
    %71 = tpu.matmul %1, %70, %cst_45 {dimension_numbers = #tpu.dot_dimension_numbers<[1], [0], [0], [1], [0, 0, 1, 1], [], []>} : vector<8x4xf32>, vector<4x32xf32>, vector<8x32xf32> -> vector<8x32xf32>
    %72 = arith.addf %68, %71 : vector<8x32xf32>
    %c1_46 = arith.constant 1 : index
    %c0_47 = arith.constant 0 : index
    %c0_48 = arith.constant 0 : index
    %73 = vector.load %arg4[%c1_46, %c0_47, %c0_48] : memref<2x1x32xf32, #tpu.memory_space<vmem>>, vector<1x1x32xf32>
    %74 = vector.shape_cast %73 : vector<1x1x32xf32> to vector<1x32xf32>
    %75 = vector.broadcast %74 : vector<1x32xf32> to vector<8x32xf32>
    %76 = arith.addf %72, %75 : vector<8x32xf32>
    %cst_49 = arith.constant dense<0.000000e+00> : vector<8xf32>
    %77 = vector.multi_reduction <add>, %76, %cst_49 [1] : vector<8x32xf32> to vector<8xf32>
    %78 = vector.shape_cast %77 : vector<8xf32> to vector<8x1xf32>
    %cst_50 = arith.constant 3.200000e+01 : f32
    %79 = vector.broadcast %cst_50 : f32 to vector<8x1xf32>
    %80 = arith.divf %78, %79 : vector<8x1xf32>
    %81 = vector.broadcast %80 : vector<8x1xf32> to vector<8x32xf32>
    %82 = arith.subf %76, %81 : vector<8x32xf32>
    %83 = arith.mulf %82, %82 : vector<8x32xf32>
    %cst_51 = arith.constant dense<0.000000e+00> : vector<8xf32>
    %84 = vector.multi_reduction <add>, %83, %cst_51 [1] : vector<8x32xf32> to vector<8xf32>
    %85 = vector.shape_cast %84 : vector<8xf32> to vector<8x1xf32>
    %cst_52 = arith.constant 3.200000e+01 : f32
    %86 = vector.broadcast %cst_52 : f32 to vector<8x1xf32>
    %87 = arith.divf %85, %86 : vector<8x1xf32>
    %cst_53 = arith.constant 9.99999974E-6 : f32
    %88 = vector.broadcast %cst_53 : f32 to vector<8x1xf32>
    %89 = arith.addf %87, %88 : vector<8x1xf32>
    %90 = math.rsqrt %89 : vector<8x1xf32>
    %91 = vector.broadcast %90 : vector<8x1xf32> to vector<8x32xf32>
    %92 = arith.mulf %82, %91 : vector<8x32xf32>
    %cst_54 = arith.constant 0.000000e+00 : f32
    %93 = vector.broadcast %cst_54 : f32 to vector<8x32xf32>
    %94 = arith.maximumf %92, %93 : vector<8x32xf32>
    %c1_55 = arith.constant 1 : index
    %c0_56 = arith.constant 0 : index
    %c0_57 = arith.constant 0 : index
    %95 = vector.load %arg5[%c1_55, %c0_56, %c0_57] : memref<2x32x32xf32, #tpu.memory_space<vmem>>, vector<1x32x32xf32>
    %96 = vector.shape_cast %95 : vector<1x32x32xf32> to vector<32x32xf32>
    %cst_58 = arith.constant dense<0.000000e+00> : vector<8x32xf32>
    %97 = tpu.matmul %94, %96, %cst_58 {dimension_numbers = #tpu.dot_dimension_numbers<[1], [0], [0], [1], [0, 0, 1, 1], [], []>} : vector<8x32xf32>, vector<32x32xf32>, vector<8x32xf32> -> vector<8x32xf32>
    %c1_59 = arith.constant 1 : index
    %c0_60 = arith.constant 0 : index
    %c0_61 = arith.constant 0 : index
    %98 = vector.load %arg6[%c1_59, %c0_60, %c0_61] : memref<2x1x32xf32, #tpu.memory_space<vmem>>, vector<1x1x32xf32>
    %99 = vector.shape_cast %98 : vector<1x1x32xf32> to vector<1x32xf32>
    %100 = vector.broadcast %99 : vector<1x32xf32> to vector<8x32xf32>
    %101 = arith.addf %97, %100 : vector<8x32xf32>
    %cst_62 = arith.constant dense<0.000000e+00> : vector<8xf32>
    %102 = vector.multi_reduction <add>, %101, %cst_62 [1] : vector<8x32xf32> to vector<8xf32>
    %103 = vector.shape_cast %102 : vector<8xf32> to vector<8x1xf32>
    %cst_63 = arith.constant 3.200000e+01 : f32
    %104 = vector.broadcast %cst_63 : f32 to vector<8x1xf32>
    %105 = arith.divf %103, %104 : vector<8x1xf32>
    %106 = vector.broadcast %105 : vector<8x1xf32> to vector<8x32xf32>
    %107 = arith.subf %101, %106 : vector<8x32xf32>
    %108 = arith.mulf %107, %107 : vector<8x32xf32>
    %cst_64 = arith.constant dense<0.000000e+00> : vector<8xf32>
    %109 = vector.multi_reduction <add>, %108, %cst_64 [1] : vector<8x32xf32> to vector<8xf32>
    %110 = vector.shape_cast %109 : vector<8xf32> to vector<8x1xf32>
    %cst_65 = arith.constant 3.200000e+01 : f32
    %111 = vector.broadcast %cst_65 : f32 to vector<8x1xf32>
    %112 = arith.divf %110, %111 : vector<8x1xf32>
    %cst_66 = arith.constant 9.99999974E-6 : f32
    %113 = vector.broadcast %cst_66 : f32 to vector<8x1xf32>
    %114 = arith.addf %112, %113 : vector<8x1xf32>
    %115 = math.rsqrt %114 : vector<8x1xf32>
    %116 = vector.broadcast %115 : vector<8x1xf32> to vector<8x32xf32>
    %117 = arith.mulf %107, %116 : vector<8x32xf32>
    %cst_67 = arith.constant 0.000000e+00 : f32
    %118 = vector.broadcast %cst_67 : f32 to vector<8x32xf32>
    %119 = arith.maximumf %117, %118 : vector<8x32xf32>
    %c1_68 = arith.constant 1 : index
    %c0_69 = arith.constant 0 : index
    %c0_70 = arith.constant 0 : index
    %120 = vector.load %arg7[%c1_68, %c0_69, %c0_70] : memref<2x1x32xf32, #tpu.memory_space<vmem>>, vector<1x1x32xf32>
    %121 = vector.shape_cast %120 : vector<1x1x32xf32> to vector<1x32xf32>
    %122 = vector.broadcast %121 : vector<1x32xf32> to vector<8x32xf32>
    %123 = arith.mulf %119, %122 : vector<8x32xf32>
    %cst_71 = arith.constant dense<0.000000e+00> : vector<8xf32>
    %124 = vector.multi_reduction <add>, %123, %cst_71 [1] : vector<8x32xf32> to vector<8xf32>
    %125 = vector.shape_cast %124 : vector<8xf32> to vector<8x1xf32>
    %c1_72 = arith.constant 1 : index
    %c0_73 = arith.constant 0 : index
    %c0_74 = arith.constant 0 : index
    %126 = vector.load %arg8[%c1_72, %c0_73, %c0_74] : memref<2x1x1xf32, #tpu.memory_space<vmem>>, vector<1x1x1xf32>
    %127 = vector.shape_cast %126 : vector<1x1x1xf32> to vector<1x1xf32>
    %128 = vector.broadcast %127 : vector<1x1xf32> to vector<8x1xf32>
    %129 = arith.addf %125, %128 : vector<8x1xf32>
    %130 = tpu.iota {dimensions = array<i32: 1>} : vector<8x2xi32>
    %c0_i32 = arith.constant 0 : i32
    %131 = vector.broadcast %c0_i32 : i32 to vector<8x2xi32>
    %132 = arith.cmpi eq, %130, %131 : vector<8x2xi32>
    %133 = vector.shape_cast %65 : vector<8x1xf32> to vector<8x1xf32>
    %134 = vector.broadcast %133 : vector<8x1xf32> to vector<8x2xf32>
    %135 = vector.shape_cast %129 : vector<8x1xf32> to vector<8x1xf32>
    %136 = vector.broadcast %135 : vector<8x1xf32> to vector<8x2xf32>
    %137 = arith.select %132, %134, %136 : vector<8x2xi1>, vector<8x2xf32>
    %c0_75 = arith.constant 0 : index
    %c0_76 = arith.constant 0 : index
    %138 = vector.load %arg9[%c0_75, %c0_76] : memref<8x2xf32, #tpu.memory_space<vmem>>, vector<8x2xf32>
    tpu.vector_store %arg9[%c0_75, %c0_76], %137 {strides = array<i32>} : memref<8x2xf32, #tpu.memory_space<vmem>>, vector<8x2xf32>,
    return
  }
}

</mosaic_0001>

<llo_original>
// kernel: tpu_custom_call.1
$region0: #{tpu_custom_call.1}
  #allocation0 [shape = 'u32[]', space=smem, size = 0x4, offset = 0x4, fixed_abs, tag = 'smem constant byte address 0x4 - core index']
  #allocation1 [shape = 'u32[72,128]{1,0:T(1,128)}', space=vmem, size = 0x9000, scoped, tag = 'internal scratch']
  %s0 = inlined_call_operand.hbm [shape: f32[8,12], index: 0, kind: input, shape index: {}]
  %s1 = inlined_call_operand.vmem [shape: f32[8,4], index: 1, kind: input, shape index: {}]
  %s2 = inlined_call_operand.vmem [shape: f32[2,12,32], index: 2, kind: input, shape index: {}]
  %s3 = inlined_call_operand.hbm [shape: f32[2,4,32], index: 3, kind: input, shape index: {}]
  %s4 = inlined_call_operand.vmem [shape: f32[2,1,32], index: 4, kind: input, shape index: {}]
  %s5 = inlined_call_operand.vmem [shape: f32[2,32,32], index: 5, kind: input, shape index: {}]
  %s6 = inlined_call_operand.vmem [shape: f32[2,1,32], index: 6, kind: input, shape index: {}]
  %s7 = inlined_call_operand.vmem [shape: f32[2,1,32], index: 7, kind: input, shape index: {}]
  %s8 = inlined_call_operand.vmem [shape: f32[2,1,1], index: 8, kind: input, shape index: {}]
  %s9 = inlined_call_operand.vmem [shape: f32[8,2], index: 9, kind: output, shape index: {}]
  %s10 = sld [smem:[#allocation0]]
  $region54: #{tpu_custom_call.1} parent=0
    _
  %s12 = ssub.s32 1, %s10
  %s13 = scalar_select 0, %s12, %s10
  $region1: #{tpu_custom_call.1} parent=0
    #allocation2 [shape = 'u8[4096]{0}', space=vmem, size = 0x1000, scoped, tag = 'input window, operand 0, single buffered']
    #allocation3 [shape = 's32[1]{0}', space=sflag, size = 0x4, scoped, tag = 'scoped memory for tpu_custom_call.1']
    #allocation4 [shape = 'u8[4096]{0}', space=vmem, size = 0x1000, scoped, tag = 'input window, operand 3, single buffered']
    #allocation5 [shape = 's32[1]{0}', space=sflag, size = 0x4, scoped, tag = 'scoped memory for tpu_custom_call.1']
    %14 = vsyncpa [#allocation3], 0
    %15 = vsyncpa [#allocation5], 0
    // Predicated region
    $region2: #{tpu_custom_call.1} parent=1 // pred_check
      _
    $region3: #{tpu_custom_call.1} parent=1 // pred_check_branch
      %17 = sbr.rel (0) target = $region5
    $region4: #{tpu_custom_call.1} parent=1 // pred_region
      %19 = vsyncadd [#allocation3], 0
      %s21 = sshll.u32 %s0, 4
      %s22 = int_to_ptr.hbm [resolvable:$true] %s21
      %s23 = sshll.u32 [#allocation2], 4
      %s24 = int_to_ptr.vmem [resolvable:$true] %s23
      %26 = dma.hbm_to_vmem [thread:$0]  %s22, 128, %s24, [#allocation3]
    $region5: #{tpu_custom_call.1} parent=1 // pred_fallthru
      _
    // Predicated region
    $region6: #{tpu_custom_call.1} parent=1 // pred_check
      _
    $region7: #{tpu_custom_call.1} parent=1 // pred_check_branch
      %28 = sbr.rel (0) target = $region9
    $region8: #{tpu_custom_call.1} parent=1 // pred_region
      _
    $region9: #{tpu_custom_call.1} parent=1 // pred_fallthru
      _
    // Predicated region
    $region10: #{tpu_custom_call.1} parent=1 // pred_check
      _
    $region11: #{tpu_custom_call.1} parent=1 // pred_check_branch
      %30 = sbr.rel (0) target = $region13
    $region12: #{tpu_custom_call.1} parent=1 // pred_region
      _
    $region13: #{tpu_custom_call.1} parent=1 // pred_fallthru
      _
    // Predicated region
    $region14: #{tpu_custom_call.1} parent=1 // pred_check
      _
    $region15: #{tpu_custom_call.1} parent=1 // pred_check_branch
      %32 = sbr.rel (0) target = $region17
    $region16: #{tpu_custom_call.1} parent=1 // pred_region
      %34 = vsyncadd [#allocation5], 0
      %s35 = sshll.u32 %s3, 4
      %s36 = int_to_ptr.hbm [resolvable:$true] %s35
      %s37 = sshll.u32 [#allocation4], 4
      %s38 = int_to_ptr.vmem [resolvable:$true] %s37
      %43 = dma.hbm_to_vmem [thread:$0]  %s36, 128, %s38, [#allocation5], 64, 64, 4
    $region17: #{tpu_custom_call.1} parent=1 // pred_fallthru
      _
    // Predicated region
    $region18: #{tpu_custom_call.1} parent=1 // pred_check
      _
    $region19: #{tpu_custom_call.1} parent=1 // pred_check_branch
      %45 = sbr.rel (0) target = $region21
    $region20: #{tpu_custom_call.1} parent=1 // pred_region
      _
    $region21: #{tpu_custom_call.1} parent=1 // pred_fallthru
      _
    // Predicated region
    $region22: #{tpu_custom_call.1} parent=1 // pred_check
      _
    $region23: #{tpu_custom_call.1} parent=1 // pred_check_branch
      %47 = sbr.rel (0) target = $region25
    $region24: #{tpu_custom_call.1} parent=1 // pred_region
      _
    $region25: #{tpu_custom_call.1} parent=1 // pred_fallthru
      _
    // Predicated region
    $region26: #{tpu_custom_call.1} parent=1 // pred_check
      _
    $region27: #{tpu_custom_call.1} parent=1 // pred_check_branch
      %49 = sbr.rel (0) target = $region29
    $region28: #{tpu_custom_call.1} parent=1 // pred_region
      _
    $region29: #{tpu_custom_call.1} parent=1 // pred_fallthru
      _
    // Predicated region
    $region30: #{tpu_custom_call.1} parent=1 // pred_check
      _
    $region31: #{tpu_custom_call.1} parent=1 // pred_check_branch
      %51 = sbr.rel (0) target = $region33
    $region32: #{tpu_custom_call.1} parent=1 // pred_region
      _
    $region33: #{tpu_custom_call.1} parent=1 // pred_fallthru
      _
    // Predicated region
    $region34: #{tpu_custom_call.1} parent=1 // pred_check
      _
    $region35: #{tpu_custom_call.1} parent=1 // pred_check_branch
      %53 = sbr.rel (0) target = $region37
    $region36: #{tpu_custom_call.1} parent=1 // pred_region
      _
    $region37: #{tpu_custom_call.1} parent=1 // pred_fallthru
      _
    // Predicated region
    $region38: #{tpu_custom_call.1} parent=1 // pred_check
      _
    $region39: #{tpu_custom_call.1} parent=1 // pred_check_branch
      %55 = sbr.rel (0) target = $region41
    $region40: #{tpu_custom_call.1} parent=1 // pred_region
      %57 = dma.done [#allocation3], 128
    $region41: #{tpu_custom_call.1} parent=1 // pred_fallthru
      _
    // Predicated region
    $region42: #{tpu_custom_call.1} parent=1 // pred_check
      _
    $region43: #{tpu_custom_call.1} parent=1 // pred_check_branch
      %59 = sbr.rel (0) target = $region45
    $region44: #{tpu_custom_call.1} parent=1 // pred_region
      %61 = dma.done [#allocation5], 128
    $region45: #{tpu_custom_call.1} parent=1 // pred_fallthru
      _
    %v62 = vld [vmem:[#allocation2] sm:$0xff]
    %v63 = vld [vmem:[%s1] sm:$0xff]
    %v64 = vld [vmem:[%s2] sm:$0xff]
    %v65 = vld [vmem:[%s2 + $0x8] sm:$0xf]
    %v66 = vld [vmem:[#allocation4] sm:$0xf]
    %vm67 = vcmask 31744
    %v69 = vsel %vm67, %v63, 0
    %vm71 = vcmask 1043456
    %v73 = vsel %vm71, %v66, 0
    %75 = vmatpush.msra.mxu0 0.0
    %76 = vmatpush.msra.mxu0 0.0
    %77 = vmatpush.msra.mxu0 0.0
    %78 = vmatpush.msra.mxu0 0.0
    %79 = vmatpush.msra.mxu0 0.0
    %80 = vmatpush.msra.mxu0 0.0
    %81 = vmatpush.msra.mxu0 0.0
    %82 = vmatpush.msra.mxu0 0.0
    %83 = vmatpush.msra.mxu0 0.0
    %84 = vmatpush.msra.mxu0 0.0
    %85 = vmatpush.msra.mxu0 0.0
    %86 = vmatpush.msra.mxu0 0.0
    %87 = vmatpush.msra.mxu0 0.0
    %88 = vmatpush.msra.mxu0 0.0
    %89 = vmatpush.msra.mxu0 0.0
    %90 = vmatpush.msra.mxu0 %v73
    %91 = vmatmul.f32.gmra.mxu0 %v69
    %v92 = vpop.f32.mrf.mxu0
    %v93 = vadd.f32 0.0, %v92
    %94 = vdwg.mxu0
    %vm95 = vcmask 97280
    %v97 = vsel %vm95, %v62, 0
    %v100 = vsel %vm71, %v65, 0
    %102 = vmatpush.msra.mxu0 0.0
    %103 = vmatpush.msra.mxu0 0.0
    %104 = vmatpush.msra.mxu0 0.0
    %105 = vmatpush.msra.mxu0 0.0
    %106 = vmatpush.msra.mxu0 0.0
    %107 = vmatpush.msra.mxu0 0.0
    %108 = vmatpush.msra.mxu0 0.0
    %109 = vmatpush.msra.mxu0 0.0
    %110 = vmatpush.msra.mxu0 0.0
    %111 = vmatpush.msra.mxu0 0.0
    %112 = vmatpush.msra.mxu0 0.0
    %113 = vmatpush.msra.mxu0 0.0
    %114 = vmatpush.msra.mxu0 0.0
    %115 = vmatpush.msra.mxu0 0.0
    %116 = vmatpush.msra.mxu0 %v100
    %117 = vmatpush.msra.mxu0 %v64
    %118 = vmatmul.f32.gmra.mxu0 %v97
    %v119 = vpop.f32.mrf.mxu0
    %v120 = vadd.f32 %v93, %v119
    %121 = vdwg.mxu0
    %v122 = vld [vmem:[%s4] sm:$0x1]
    %v124 = vperm.slane %v122, 0
    %v126 = vadd.f32 %v120, %v124
    %vm127 = vcmask 261120
    %v128 = vsel %vm127, %v126, 0.0
    %129 = vadd.xlane.f32.xlu0 %v128
    %v130 = vpop.xlane.xlu0 %129
    %v131 = vrcp.pop 32.0
    %v132 = vmul.f32 32.0, %v131
    %v133 = vsub.f32 1.0, %v132
    %v134 = vmul.f32 %v131, %v133
    %v135 = vadd.f32 %v131, %v134
    %vm136 = vweird.f32 %v131
    %v137 = vsel %vm136, %v131, %v135
    %v138 = vmul.f32 %v130, %v137
    %v139 = vsub.f32 %v126, %v138
    %v140 = vmul.f32 %v139, %v139
    %v141 = vsel %vm127, %v140, 0.0
    %142 = vadd.xlane.f32.xlu0 %v141
    %v143 = vpop.xlane.xlu0 %142
    %v144 = vmul.f32 %v143, %v137
    %v145 = vadd.f32 %v144, 1e-05
    %v146 = vrsqrt.pop %v145
    %v147 = vmul.f32 %v146, %v145
    %v148 = vmul.f32 %v147, %v146
    %v149 = vmul.f32 0.5, %v148
    %v150 = vsub.f32 1.5, %v149
    %v151 = vmul.f32 %v146, %v150
    %vm152 = vweird.f32 %v145
    %vm153 = vweird.f32 %v146
    %vm154 = vmor %vm152, %vm153
    %v155 = vsel %vm154, %v146, %v151
    %v156 = vmul.f32 %v139, %v155
    %v157 = vmax.f32 %v156, 0.0
    %v158 = vld [vmem:[%s5] sm:$0xff]
    %v159 = vld [vmem:[%s5 + $0x8] sm:$0xff]
    %v160 = vld [vmem:[%s5 + $0x10] sm:$0xff]
    %v161 = vld [vmem:[%s5 + $0x18] sm:$0xff]
    %v162 = vld [vmem:[%s6] sm:$0x1]
    %v164 = vperm.slane %v162, 0
    %v167 = vsel %vm127, %v157, 0
    %169 = vmatpush.msra.mxu0 0.0
    %170 = vmatpush.msra.mxu0 0.0
    %171 = vmatpush.msra.mxu0 0.0
    %172 = vmatpush.msra.mxu0 0.0
    %173 = vmatpush.msra.mxu0 0.0
    %174 = vmatpush.msra.mxu0 0.0
    %175 = vmatpush.msra.mxu0 0.0
    %176 = vmatpush.msra.mxu0 0.0
    %177 = vmatpush.msra.mxu0 0.0
    %178 = vmatpush.msra.mxu0 0.0
    %179 = vmatpush.msra.mxu0 0.0
    %180 = vmatpush.msra.mxu0 0.0
    %181 = vmatpush.msra.mxu0 %v161
    %182 = vmatpush.msra.mxu0 %v160
    %183 = vmatpush.msra.mxu0 %v159
    %184 = vmatpush.msra.mxu0 %v158
    %185 = vmatmul.f32.gmra.mxu0 %v167
    %v186 = vpop.f32.mrf.mxu0
    %v187 = vadd.f32 %v164, %v186
    %188 = vdwg.mxu0
    %v189 = vsel %vm127, %v187, 0.0
    %190 = vadd.xlane.f32.xlu0 %v189
    %v191 = vpop.xlane.xlu0 %190
    %v192 = vmul.f32 %v191, %v137
    %v193 = vsub.f32 %v187, %v192
    %v194 = vmul.f32 %v193, %v193
    %v195 = vsel %vm127, %v194, 0.0
    %196 = vadd.xlane.f32.xlu0 %v195
    %v197 = vpop.xlane.xlu0 %196
    %v198 = vmul.f32 %v197, %v137
    %v199 = vadd.f32 %v198, 1e-05
    %v200 = vrsqrt.pop %v199
    %v201 = vmul.f32 %v200, %v199
    %v202 = vmul.f32 %v201, %v200
    %v203 = vmul.f32 0.5, %v202
    %v204 = vsub.f32 1.5, %v203
    %v205 = vmul.f32 %v200, %v204
    %vm206 = vweird.f32 %v199
    %vm207 = vweird.f32 %v200
    %vm208 = vmor %vm206, %vm207
    %v209 = vsel %vm208, %v200, %v205
    %v210 = vmul.f32 %v193, %v209
    %v211 = vmax.f32 %v210, 0.0
    %v212 = vld [vmem:[%s7] sm:$0x1]
    %v214 = vperm.slane %v212, 0
    %v216 = vmul.f32 %v211, %v214
    %v217 = vsel %vm127, %v216, 0.0
    %218 = vadd.xlane.f32.xlu0 %v217
    %v219 = vpop.xlane.xlu0 %218
    %v220 = vld [vmem:[%s8] sm:$0x1]
    %v222 = vperm.slane %v220, 0
    %v224 = vadd.f32 %v219, %v222
    %s225 = scalar_lea.vmem %s2, 16
    %v226 = vld [vmem:[%s225] sm:$0xff]
    %v227 = vld [vmem:[%s225 + $0x8] sm:$0xf]
    %s228 = scalar_lea.vmem [#allocation4], 4
    %v229 = vld [vmem:[%s228] sm:$0xf]
    %v231 = vsel %vm71, %v229, 0
    %233 = vmatpush.msra.mxu0 0.0
    %234 = vmatpush.msra.mxu0 0.0
    %235 = vmatpush.msra.mxu0 0.0
    %236 = vmatpush.msra.mxu0 0.0
    %237 = vmatpush.msra.mxu0 0.0
    %238 = vmatpush.msra.mxu0 0.0
    %239 = vmatpush.msra.mxu0 0.0
    %240 = vmatpush.msra.mxu0 0.0
    %241 = vmatpush.msra.mxu0 0.0
    %242 = vmatpush.msra.mxu0 0.0
    %243 = vmatpush.msra.mxu0 0.0
    %244 = vmatpush.msra.mxu0 0.0
    %245 = vmatpush.msra.mxu0 0.0
    %246 = vmatpush.msra.mxu0 0.0
    %247 = vmatpush.msra.mxu0 0.0
    %248 = vmatpush.msra.mxu0 %v231
    %249 = vmatmul.f32.gmra.mxu0 %v69
    %v250 = vpop.f32.mrf.mxu0
    %v251 = vadd.f32 0.0, %v250
    %252 = vdwg.mxu0
    %v254 = vsel %vm71, %v227, 0
    %256 = vmatpush.msra.mxu0 0.0
    %257 = vmatpush.msra.mxu0 0.0
    %258 = vmatpush.msra.mxu0 0.0
    %259 = vmatpush.msra.mxu0 0.0
    %260 = vmatpush.msra.mxu0 0.0
    %261 = vmatpush.msra.mxu0 0.0
    %262 = vmatpush.msra.mxu0 0.0
    %263 = vmatpush.msra.mxu0 0.0
    %264 = vmatpush.msra.mxu0 0.0
    %265 = vmatpush.msra.mxu0 0.0
    %266 = vmatpush.msra.mxu0 0.0
    %267 = vmatpush.msra.mxu0 0.0
    %268 = vmatpush.msra.mxu0 0.0
    %269 = vmatpush.msra.mxu0 0.0
    %270 = vmatpush.msra.mxu0 %v254
    %271 = vmatpush.msra.mxu0 %v226
    %272 = vmatmul.f32.gmra.mxu0 %v97
    %v273 = vpop.f32.mrf.mxu0
    %v274 = vadd.f32 %v251, %v273
    %275 = vdwg.mxu0
    %s276 = scalar_lea.vmem %s4, 1
    %v277 = vld [vmem:[%s276] sm:$0x1]
    %v279 = vperm.slane %v277, 0
    %v281 = vadd.f32 %v274, %v279
    %v282 = vsel %vm127, %v281, 0.0
    %283 = vadd.xlane.f32.xlu0 %v282
    %v284 = vpop.xlane.xlu0 %283
    %v285 = vmul.f32 %v284, %v137
    %v286 = vsub.f32 %v281, %v285
    %v287 = vmul.f32 %v286, %v286
    %v288 = vsel %vm127, %v287, 0.0
    %289 = vadd.xlane.f32.xlu0 %v288
    %v290 = vpop.xlane.xlu0 %289
    %v291 = vmul.f32 %v290, %v137
    %v292 = vadd.f32 %v291, 1e-05
    %v293 = vrsqrt.pop %v292
    %v294 = vmul.f32 %v293, %v292
    %v295 = vmul.f32 %v294, %v293
    %v296 = vmul.f32 0.5, %v295
    %v297 = vsub.f32 1.5, %v296
    %v298 = vmul.f32 %v293, %v297
    %vm299 = vweird.f32 %v292
    %vm300 = vweird.f32 %v293
    %vm301 = vmor %vm299, %vm300
    %v302 = vsel %vm301, %v293, %v298
    %v303 = vmul.f32 %v286, %v302
    %v304 = vmax.f32 %v303, 0.0
    %s305 = scalar_lea.vmem %s5, 32
    %v306 = vld [vmem:[%s305] sm:$0xff]
    %v307 = vld [vmem:[%s305 + $0x8] sm:$0xff]
    %v308 = vld [vmem:[%s305 + $0x10] sm:$0xff]
    %v309 = vld [vmem:[%s305 + $0x18] sm:$0xff]
    %s310 = scalar_lea.vmem %s6, 1
    %v311 = vld [vmem:[%s310] sm:$0x1]
    %v313 = vperm.slane %v311, 0
    %v316 = vsel %vm127, %v304, 0
    %318 = vmatpush.msra.mxu0 0.0
    %319 = vmatpush.msra.mxu0 0.0
    %320 = vmatpush.msra.mxu0 0.0
    %321 = vmatpush.msra.mxu0 0.0
    %322 = vmatpush.msra.mxu0 0.0
    %323 = vmatpush.msra.mxu0 0.0
    %324 = vmatpush.msra.mxu0 0.0
    %325 = vmatpush.msra.mxu0 0.0
    %326 = vmatpush.msra.mxu0 0.0
    %327 = vmatpush.msra.mxu0 0.0
    %328 = vmatpush.msra.mxu0 0.0
    %329 = vmatpush.msra.mxu0 0.0
    %330 = vmatpush.msra.mxu0 %v309
    %331 = vmatpush.msra.mxu0 %v308
    %332 = vmatpush.msra.mxu0 %v307
    %333 = vmatpush.msra.mxu0 %v306
    %334 = vmatmul.f32.gmra.mxu0 %v316
    %v335 = vpop.f32.mrf.mxu0
    %v336 = vadd.f32 %v313, %v335
    %337 = vdwg.mxu0
    %v338 = vsel %vm127, %v336, 0.0
    %339 = vadd.xlane.f32.xlu0 %v338
    %v340 = vpop.xlane.xlu0 %339
    %v341 = vmul.f32 %v340, %v137
    %v342 = vsub.f32 %v336, %v341
    %v343 = vmul.f32 %v342, %v342
    %v344 = vsel %vm127, %v343, 0.0
    %345 = vadd.xlane.f32.xlu0 %v344
    %v346 = vpop.xlane.xlu0 %345
    %v347 = vmul.f32 %v346, %v137
    %v348 = vadd.f32 %v347, 1e-05
    %v349 = vrsqrt.pop %v348
    %v350 = vmul.f32 %v349, %v348
    %v351 = vmul.f32 %v350, %v349
    %v352 = vmul.f32 0.5, %v351
    %v353 = vsub.f32 1.5, %v352
    %v354 = vmul.f32 %v349, %v353
    %vm355 = vweird.f32 %v348
    %vm356 = vweird.f32 %v349
    %vm357 = vmor %vm355, %vm356
    %v358 = vsel %vm357, %v349, %v354
    %v359 = vmul.f32 %v342, %v358
    %v360 = vmax.f32 %v359, 0.0
    %s361 = scalar_lea.vmem %s7, 1
    %v362 = vld [vmem:[%s361] sm:$0x1]
    %v364 = vperm.slane %v362, 0
    %v366 = vmul.f32 %v360, %v364
    %v367 = vsel %vm127, %v366, 0.0
    %368 = vadd.xlane.f32.xlu0 %v367
    %v369 = vpop.xlane.xlu0 %368
    %s370 = scalar_lea.vmem %s8, 1
    %v371 = vld [vmem:[%s370] sm:$0x1]
    %v373 = vperm.slane %v371, 0
    %v375 = vadd.f32 %v369, %v373
    %v376 = vlaneseq
    %v377 = vand.u32 %v376, 127
    %vm378 = vcmp.eq.s32.totalorder %v377, 0
    %380 = vset.pattern.permute.xlu0 0
    %381 = vperm.xlu0 %380, %v224
    %v382 = vpop.permute.xlu0 %381
    %385 = vset.pattern.permute.xlu0 0
    %386 = vperm.xlu0 %385, %v375
    %v387 = vpop.permute.xlu0 %386
    %v389 = vsel %vm378, %v382, %v387
    %vm390 = vcmask 15360
    %391 = vst.msk [vmem:[%s9] sm:$0xff] %vm390, %v389
    // Predicated region
    $region46: #{tpu_custom_call.1} parent=1 // pred_check
      _
    $region47: #{tpu_custom_call.1} parent=1 // pred_check_branch
      %393 = sbr.rel (0) target = $region49
    $region48: #{tpu_custom_call.1} parent=1 // pred_region
      _
    $region49: #{tpu_custom_call.1} parent=1 // pred_fallthru
      _
    // Predicated region
    $region50: #{tpu_custom_call.1} parent=1 // pred_check
      _
    $region51: #{tpu_custom_call.1} parent=1 // pred_check_branch
      %395 = sbr.rel (0) target = $region53
    $region52: #{tpu_custom_call.1} parent=1 // pred_region
      _
    $region53: #{tpu_custom_call.1} parent=1 // pred_fallthru
      _
    %396 = vsyncpa [#allocation3], 1
    %397 = vsyncpa [#allocation5], 1

</llo_original>
